<compile_context>
chip_gen: v6e
topology: v6e:2x2x1
jax: 0.10.0
libtpu: 0.0.40
codegen_flags: <defaults>
</compile_context>

<pallas_src>
import math

import jax
import jax.numpy as jnp
from jax import lax
from jax.experimental import pallas as pl
from jax.experimental.pallas import tpu as pltpu

COMPUTE_DTYPE = jnp.bfloat16      # MXU operand dtype; accumulation stays f32


# ---------------------------------------------------------------------------
# Tiling helpers
# ---------------------------------------------------------------------------
def _pick(dim, target):
    """Use `target` if it divides `dim` exactly, otherwise the full dim."""
    return target if dim % target == 0 else dim


def _time_chunk(T, max_chunk=16):
    """Largest divisor of T that is <= max_chunk (timesteps per grid step)."""
    for c in range(min(T, max_chunk), 0, -1):
        if T % c == 0:
            return c
    return 1


# ---------------------------------------------------------------------------
# Tiled matmul + bias kernel (input projection and classifier)
# ---------------------------------------------------------------------------
def _matmul_bias_kernel(x_ref, w_ref, b_ref, o_ref, acc_ref):
    @pl.when(pl.program_id(2) == 0)
    def _():
        acc_ref[...] = jnp.zeros_like(acc_ref)

    acc_ref[...] += jnp.dot(x_ref[...], w_ref[...],
                            preferred_element_type=jnp.float32)

    @pl.when(pl.program_id(2) == pl.num_programs(2) - 1)
    def _():
        o_ref[...] = (acc_ref[...] + b_ref[...]).astype(o_ref.dtype)


def linear(x, w, b, *, tm=256, tk=512, tn=1024):
    """x: (M, K) bf16, w: (K, N) bf16, b: (N,) f32 -> (M, N) f32, tiled over MXU."""
    M, K = x.shape
    K2, N = w.shape
    assert K2 == K
    tm, tk, tn = _pick(M, tm), _pick(K, tk), _pick(N, tn)
    grid = (M // tm, N // tn, K // tk)
    return pl.pallas_call(
        _matmul_bias_kernel,
        out_shape=jax.ShapeDtypeStruct((M, N), jnp.float32),
        grid=grid,
        in_specs=[
            pl.BlockSpec((tm, tk), lambda i, j, k: (i, k)),
            pl.BlockSpec((tk, tn), lambda i, j, k: (k, j)),
            pl.BlockSpec((1, tn), lambda i, j, k: (0, j)),
        ],
        out_specs=pl.BlockSpec((tm, tn), lambda i, j, k: (i, j)),
        scratch_shapes=[pltpu.VMEM((tm, tn), jnp.float32)],
        compiler_params=pltpu.CompilerParams(
            dimension_semantics=("parallel", "parallel", "arbitrary"),
            vmem_limit_bytes=64 * 1024 * 1024),
    )(x, w, b.reshape(1, N))


# ---------------------------------------------------------------------------
# LSTM recurrence kernel (input projection already applied)
# ---------------------------------------------------------------------------
def _lstm_recur_kernel(xg_ref, wh_ref, h0_ref, c0_ref,
                       y_ref, hN_ref, cN_ref, h_s, c_s):
    """One grid step = T_CHUNK timesteps of the recurrence for one batch chunk.

    grid = (batch_chunks ['parallel'], T // T_CHUNK ['arbitrary']).
    h_s / c_s VMEM scratch carries the recurrent f32 state across time chunks.
    Gate order along the 4H axis: [input, forget, output, candidate].
    """
    ti = pl.program_id(1)
    TC = xg_ref.shape[0]
    H = h_s.shape[-1]

    @pl.when(ti == 0)
    def _():
        h_s[...] = h0_ref[...]
        c_s[...] = c0_ref[...]

    wh = wh_ref[...]                                   # (H, 4H) bf16, resident

    def step(tl, carry):
        h = h_s[...]
        c = c_s[...]
        # Only the hidden matmul remains in the serial loop; x @ Wx + b was
        # hoisted into the big tiled matmul feeding xg_ref.
        gates = xg_ref[tl] + jnp.dot(h.astype(wh.dtype), wh,
                                     preferred_element_type=jnp.float32)
        # NOTE: gate slices are 128-lane aligned whenever H % 128 == 0.
        i_g = jax.nn.sigmoid(gates[:, 0:H])
        f_g = jax.nn.sigmoid(gates[:, H:2 * H])
        o_g = jax.nn.sigmoid(gates[:, 2 * H:3 * H])
        g_g = jnp.tanh(gates[:, 3 * H:4 * H])
        c_new = f_g * c + i_g * g_g
        h_new = o_g * jnp.tanh(c_new)
        h_s[...] = h_new
        c_s[...] = c_new
        y_ref[tl] = h_new
        return carry

    lax.fori_loop(0, TC, step, 0, unroll=True)

    # Store final states only once (saves 2 (B,H) vector stores per timestep).
    @pl.when(ti == pl.num_programs(1) - 1)
    def _():
        hN_ref[...] = h_s[...]
        cN_ref[...] = c_s[...]


def lstm_recurrence(xg_tbg, wh, h0, c0, *, time_chunk, batch_chunks):
    """xg_tbg: (T, B, 4H) f32 gate pre-activations; wh: (H, 4H) bf16."""
    T, B, G = xg_tbg.shape
    H = wh.shape[0]
    BC = B // batch_chunks
    NT = T // time_chunk
    out_shapes = (jax.ShapeDtypeStruct((T, B, H), jnp.float32),
                  jax.ShapeDtypeStruct((B, H), jnp.float32),
                  jax.ShapeDtypeStruct((B, H), jnp.float32))
    return pl.pallas_call(
        _lstm_recur_kernel,
        out_shape=out_shapes,
        grid=(batch_chunks, NT),
        in_specs=[
            pl.BlockSpec((time_chunk, BC, G), lambda bi, ti: (ti, bi, 0)),  # xg
            pl.BlockSpec((H, G), lambda bi, ti: (0, 0)),                    # Wh
            pl.BlockSpec((BC, H), lambda bi, ti: (bi, 0)),                  # h0
            pl.BlockSpec((BC, H), lambda bi, ti: (bi, 0)),                  # c0
        ],
        out_specs=(
            pl.BlockSpec((time_chunk, BC, H), lambda bi, ti: (ti, bi, 0)),  # y
            pl.BlockSpec((BC, H), lambda bi, ti: (bi, 0)),                  # h_T
            pl.BlockSpec((BC, H), lambda bi, ti: (bi, 0)),                  # c_T
        ),
        scratch_shapes=[pltpu.VMEM((BC, H), jnp.float32),                   # h carry
                        pltpu.VMEM((BC, H), jnp.float32)],                  # c carry
        compiler_params=pltpu.CompilerParams(
            dimension_semantics=("parallel", "arbitrary"),
            vmem_limit_bytes=64 * 1024 * 1024),
    )(xg_tbg, wh, h0, c0)


# ---------------------------------------------------------------------------
# Parameter initialization (deterministic, mirrors the PyTorch __init__)
# ---------------------------------------------------------------------------
def init_params(key, vocab, emb, hidden, num_layers):
    keys = jax.random.split(key, 3 + 4 * num_layers)
    params = {}
    # nn.Embedding default init: N(0, 1).  padding_index is None here.
    params["embedding"] = jax.random.normal(keys[0], (vocab, emb), jnp.float32)
    # classifier nn.Linear default init: U(-1/sqrt(in), 1/sqrt(in))
    k = 1.0 / math.sqrt(hidden)
    params["cls_w"] = jax.random.uniform(keys[1], (vocab, hidden), jnp.float32, -k, k)
    params["cls_b"] = jax.random.uniform(keys[2], (vocab,), jnp.float32, -k, k)

    layers = []
    for l in range(num_layers):
        in_size = emb if l == 0 else hidden
        comb = in_size + hidden
        a = math.sqrt(6.0 / (comb + hidden))        # xavier_uniform, gain=1
        gate_wts = []
        for g in range(4):                          # order: input, forget, output, candidate
            wk = keys[3 + 4 * l + g]
            w = jax.random.uniform(wk, (hidden, comb), jnp.float32, -a, a)
            gate_wts.append(w.T)                    # (comb, H)
        # combined = cat([x, h]) -> first `in_size` rows act on x, rest on h
        wx = jnp.concatenate([w[:in_size] for w in gate_wts], axis=1)  # (in_size, 4H)
        wh = jnp.concatenate([w[in_size:] for w in gate_wts], axis=1)  # (H, 4H)
        b = jnp.zeros((4 * hidden,), jnp.float32)   # biases init to zero
        layers.append((wx, wh, b))
    params["layers"] = layers
    return params


# ---------------------------------------------------------------------------
# LSTMLM forward (wrapper: glue in JAX, hot path in Pallas)
# ---------------------------------------------------------------------------
def lstm_lm_forward(params, tokens, hidden_states=None, compute_dtype=COMPUTE_DTYPE):
    B, T = tokens.shape
    layers = params["layers"]
    H = layers[0][1].shape[0]
    L = len(layers)
    V, E = params["embedding"].shape

    # Embedding: ragged row-gather has no clean rectangular BlockSpec; kept in JAX.
    emb = params["embedding"][tokens]                     # (B, T, E) f32

    if hidden_states is None:
        h0 = jnp.zeros((L, B, H), jnp.float32)
        c0 = jnp.zeros((L, B, H), jnp.float32)
    else:
        h0, c0 = hidden_states

    time_chunk = _time_chunk(T)                           # amortize grid overhead
    batch_chunks = 2 if (B % 16 == 0) else 1              # v7x: shard B over 2 TCs

    x = jnp.transpose(emb, (1, 0, 2))                     # time-major (T, B, E)
    h_fin, c_fin = [], []
    for l, (wx, wh, b) in enumerate(layers):
        in_size = x.shape[-1]
        # 1) Hoisted input projection: one big (T*B, in) x (in, 4H) MXU matmul.
        xg = linear(x.reshape(T * B, in_size).astype(compute_dtype),
                    wx.astype(compute_dtype), b)
        xg = xg.reshape(T, B, 4 * H)
        # 2) Serial recurrence over time chunks (only the hidden matmul per step).
        x, hN, cN = lstm_recurrence(xg, wh.astype(compute_dtype),
                                    h0[l], c0[l],
                                    time_chunk=time_chunk,
                                    batch_chunks=batch_chunks)
        h_fin.append(hN)
        c_fin.append(cN)
        # TODO(synk): inter-layer nn.Dropout not implemented (dropout=0.0 here).

    out_btH = jnp.transpose(x, (1, 0, 2))                 # (B, T, H)
    logits = linear(out_btH.reshape(B * T, H).astype(compute_dtype),
                    params["cls_w"].T.astype(compute_dtype), params["cls_b"])
    logits = logits.reshape(B, T, V)

    h_n = jnp.stack(h_fin, axis=0)                        # (L, B, H)
    c_n = jnp.stack(c_fin, axis=0)
    return logits, (h_n, c_n)


# ---------------------------------------------------------------------------
# Pure-JAX reference (same math, same bf16 casts) for validation
# ---------------------------------------------------------------------------
def reference_forward(params, tokens, compute_dtype=COMPUTE_DTYPE):
    B, T = tokens.shape
    H = params["layers"][0][1].shape[0]
    out = params["embedding"][tokens]                     # (B, T, E) f32
    h_fin, c_fin = [], []
    for (wx, wh, b) in params["layers"]:
        wx_c = wx.astype(compute_dtype)
        wh_c = wh.astype(compute_dtype)
        xg = jnp.dot(out.astype(compute_dtype), wx_c,
                     preferred_element_type=jnp.float32) + b      # (B, T, 4H)
        h = jnp.zeros((B, H), jnp.float32)
        c = jnp.zeros((B, H), jnp.float32)
        ys = []
        for t in range(T):
            gates = xg[:, t, :] + jnp.dot(h.astype(compute_dtype), wh_c,
                                          preferred_element_type=jnp.float32)
            i = jax.nn.sigmoid(gates[:, :H])
            f = jax.nn.sigmoid(gates[:, H:2 * H])
            o = jax.nn.sigmoid(gates[:, 2 * H:3 * H])
            g = jnp.tanh(gates[:, 3 * H:])
            c = f * c + i * g
            h = o * jnp.tanh(c)
            ys.append(h)
        out = jnp.stack(ys, axis=1)
        h_fin.append(h)
        c_fin.append(c)
    logits = jnp.dot(out.astype(compute_dtype),
                     params["cls_w"].T.astype(compute_dtype),
                     preferred_element_type=jnp.float32) + params["cls_b"]
    return logits, (jnp.stack(h_fin), jnp.stack(c_fin))


if __name__ == "__main__":
    VOCAB, EMB, HIDDEN, NUM_LAYERS = 64, 32, 32, 2
    B, T = 2, 8

    key = jax.random.PRNGKey(0)
    pkey, tkey = jax.random.split(key)
    params = init_params(pkey, VOCAB, EMB, HIDDEN, NUM_LAYERS)
    tokens = jax.random.randint(tkey, (B, T), 0, VOCAB, dtype=jnp.int32)

    logits, (h_n, c_n) = lstm_lm_forward(params, tokens)
    jax.block_until_ready((logits, h_n, c_n))

    ref_logits, (ref_h, ref_c) = reference_forward(params, tokens)
    assert logits.shape == (B, T, VOCAB)
    assert h_n.shape == (NUM_LAYERS, B, HIDDEN) and c_n.shape == (NUM_LAYERS, B, HIDDEN)
    assert jnp.allclose(logits, ref_logits, atol=2e-3, rtol=2e-3)
    assert jnp.allclose(h_n, ref_h, atol=2e-3, rtol=2e-3)
    assert jnp.allclose(c_n, ref_c, atol=2e-3, rtol=2e-3)

    print("KERNEL_OK")
</pallas_src>

<mosaic_0001>
module attributes {stable_mosaic.version = 11 : i64} {
  func.func @_matmul_bias_kernel(%arg0: i32, %arg1: i32, %arg2: i32, %arg3: memref<16x32xbf16, #tpu.memory_space<vmem>>, %arg4: memref<32x128xbf16, #tpu.memory_space<vmem>>, %arg5: memref<1x128xf32, #tpu.memory_space<vmem>>, %arg6: memref<16x128xf32, #tpu.memory_space<vmem>>, %arg7: memref<16x128xf32, #tpu.memory_space<vmem>>) attributes {dimension_semantics = [#tpu.dimension_semantics<parallel>, #tpu.dimension_semantics<parallel>, #tpu.dimension_semantics<arbitrary>], iteration_bounds = array<i64: 1, 1, 1>, scalar_prefetch = 0 : i64, scratch_operands = 1 : i64, tpu.core_type = #tpu.core_type<tc>, window_params = [{transform_indices = @transform_0, window_bounds = array<i64: 16, 32>}, {transform_indices = @transform_1, window_bounds = array<i64: 32, 128>}, {transform_indices = @transform_2, window_bounds = array<i64: 1, 128>}, {transform_indices = @transform_3, window_bounds = array<i64: 16, 128>}]} {
    %c0_i32 = arith.constant 0 : i32
    %0 = arith.cmpi eq, %arg2, %c0_i32 : i32
    %1 = arith.extui %0 : i1 to i32
    %c0_i32_0 = arith.constant 0 : i32
    %2 = arith.cmpi ne, %1, %c0_i32_0 : i32
    scf.if %2 {
      %cst_10 = arith.constant 0.000000e+00 : f32
      %12 = vector.broadcast %cst_10 : f32 to vector<16x128xf32>
      %c0_11 = arith.constant 0 : index
      %c0_12 = arith.constant 0 : index
      %13 = vector.load %arg7[%c0_11, %c0_12] : memref<16x128xf32, #tpu.memory_space<vmem>>, vector<16x128xf32>
      tpu.vector_store %arg7[%c0_11, %c0_12], %12 {strides = array<i32>} : memref<16x128xf32, #tpu.memory_space<vmem>>, vector<16x128xf32>,
    } else {
    }
    %c0 = arith.constant 0 : index
    %c0_1 = arith.constant 0 : index
    %3 = vector.load %arg7[%c0, %c0_1] : memref<16x128xf32, #tpu.memory_space<vmem>>, vector<16x128xf32>
    %c0_2 = arith.constant 0 : index
    %c0_3 = arith.constant 0 : index
    %4 = vector.load %arg3[%c0_2, %c0_3] : memref<16x32xbf16, #tpu.memory_space<vmem>>, vector<16x32xbf16>
    %c0_4 = arith.constant 0 : index
    %c0_5 = arith.constant 0 : index
    %5 = vector.load %arg4[%c0_4, %c0_5] : memref<32x128xbf16, #tpu.memory_space<vmem>>, vector<32x128xbf16>
    %cst = arith.constant dense<0.000000e+00> : vector<16x128xf32>
    %6 = tpu.matmul %4, %5, %cst {dimension_numbers = #tpu.dot_dimension_numbers<[1], [0], [0], [1], [0, 0, 1, 1], [], []>} : vector<16x32xbf16>, vector<32x128xbf16>, vector<16x128xf32> -> vector<16x128xf32>
    %7 = arith.addf %3, %6 : vector<16x128xf32>
    %c0_6 = arith.constant 0 : index
    %c0_7 = arith.constant 0 : index
    %8 = vector.load %arg7[%c0_6, %c0_7] : memref<16x128xf32, #tpu.memory_space<vmem>>, vector<16x128xf32>
    tpu.vector_store %arg7[%c0_6, %c0_7], %7 {strides = array<i32>} : memref<16x128xf32, #tpu.memory_space<vmem>>, vector<16x128xf32>,
    %c0_i32_8 = arith.constant 0 : i32
    %9 = arith.cmpi eq, %arg2, %c0_i32_8 : i32
    %10 = arith.extui %9 : i1 to i32
    %c0_i32_9 = arith.constant 0 : i32
    %11 = arith.cmpi ne, %10, %c0_i32_9 : i32
    scf.if %11 {
      %c0_10 = arith.constant 0 : index
      %c0_11 = arith.constant 0 : index
      %12 = vector.load %arg7[%c0_10, %c0_11] : memref<16x128xf32, #tpu.memory_space<vmem>>, vector<16x128xf32>
      %c0_12 = arith.constant 0 : index
      %c0_13 = arith.constant 0 : index
      %13 = vector.load %arg5[%c0_12, %c0_13] : memref<1x128xf32, #tpu.memory_space<vmem>>, vector<1x128xf32>
      %14 = vector.broadcast %13 : vector<1x128xf32> to vector<16x128xf32>
      %15 = arith.addf %12, %14 : vector<16x128xf32>
      %c0_14 = arith.constant 0 : index
      %c0_15 = arith.constant 0 : index
      %16 = vector.load %arg6[%c0_14, %c0_15] : memref<16x128xf32, #tpu.memory_space<vmem>>, vector<16x128xf32>
      tpu.vector_store %arg6[%c0_14, %c0_15], %15 {strides = array<i32>} : memref<16x128xf32, #tpu.memory_space<vmem>>, vector<16x128xf32>,
    } else {
    }
    return
  }
  func.func @transform_0(%arg0: i32, %arg1: i32, %arg2: i32) -> (i32, i32) {
    %c0_i32 = arith.constant 0 : i32
    return %arg0, %arg2 : i32, i32
  }
  func.func @transform_1(%arg0: i32, %arg1: i32, %arg2: i32) -> (i32, i32) {
    %c0_i32 = arith.constant 0 : i32
    return %arg2, %arg1 : i32, i32
  }
  func.func @transform_2(%arg0: i32, %arg1: i32, %arg2: i32) -> (i32, i32) {
    %c0_i32 = arith.constant 0 : i32
    %c0_i32_0 = arith.constant 0 : i32
    return %c0_i32, %arg1 : i32, i32
  }
  func.func @transform_3(%arg0: i32, %arg1: i32, %arg2: i32) -> (i32, i32) {
    %c0_i32 = arith.constant 0 : i32
    return %arg0, %arg1 : i32, i32
  }
}

</mosaic_0001>

<llo_original>
// kernel: tpu_custom_call.1
$region0: #{tpu_custom_call.1}
  #allocation0 [shape = 'u32[]', space=smem, size = 0x4, offset = 0x4, fixed_abs, tag = 'smem constant byte address 0x4 - core index']
  #allocation1 [shape = 'u32[144,128]{1,0:T(1,128)}', space=vmem, size = 0x12000, scoped, tag = 'internal scratch']
  #allocation2 [shape = 'f32[16,128]{1,0:T(8,128)}', space=vmem, size = 0x2000, scoped, tag = 'scratch operand']
  %s0 = inlined_call_operand.hbm [shape: bf16[16,32], index: 0, kind: input, shape index: {}]
  %s1 = inlined_call_operand.hbm [shape: bf16[32,128], index: 1, kind: input, shape index: {}]
  %s2 = inlined_call_operand.vmem [shape: f32[1,128], index: 2, kind: input, shape index: {}]
  %s3 = inlined_call_operand.hbm [shape: f32[16,128], index: 3, kind: output, shape index: {}]
  %s4 = sld [smem:[#allocation0]]
  $region38: #{tpu_custom_call.1} parent=0
    _
  %s6 = ssub.s32 1, %s4
  %s7 = scalar_select 0, %s6, %s4
  $region1: #{tpu_custom_call.1} parent=0
    #allocation3 [shape = 'u8[4096]{0}', space=vmem, size = 0x1000, scoped, tag = 'input window, operand 0, single buffered']
    #allocation4 [shape = 's32[1]{0}', space=sflag, size = 0x4, scoped, tag = 'scoped memory for tpu_custom_call.1']
    #allocation5 [shape = 's32[1]{0}', space=sflag, size = 0x4, scoped, tag = 'scoped memory for tpu_custom_call.1']
    #allocation6 [shape = 'u8[8192]{0}', space=vmem, size = 0x2000, scoped, tag = 'input window, operand 1, single buffered']
    #allocation7 [shape = 's32[1]{0}', space=sflag, size = 0x4, scoped, tag = 'scoped memory for tpu_custom_call.1']
    #allocation8 [shape = 'u8[8192]{0}', space=vmem, size = 0x2000, scoped, tag = 'output window, operand 0, single buffered']
    %8 = vsyncpa [#allocation4], 0
    %9 = vsyncpa [#allocation7], 0
    %10 = vsyncpa [#allocation5], 0
    // Predicated region
    $region2: #{tpu_custom_call.1} parent=1 // pred_check
      _
    $region3: #{tpu_custom_call.1} parent=1 // pred_check_branch
      %12 = sbr.rel (0) target = $region5
    $region4: #{tpu_custom_call.1} parent=1 // pred_region
      %s14 = ssub.s32 128, 128
      %15 = vsyncadd [#allocation4], %s14
      %s16 = sshll.u32 [#allocation3], 4
      %s17 = int_to_ptr.vmem [resolvable:$true] %s16
      %22 = dma.hbm_to_vmem [thread:$0]  %s0, 128, %s17, [#allocation4], 64, 64, 4
    $region5: #{tpu_custom_call.1} parent=1 // pred_fallthru
      _
    // Predicated region
    $region6: #{tpu_custom_call.1} parent=1 // pred_check
      _
    $region7: #{tpu_custom_call.1} parent=1 // pred_check_branch
      %24 = sbr.rel (0) target = $region9
    $region8: #{tpu_custom_call.1} parent=1 // pred_region
      %s26 = ssub.s32 256, 256
      %27 = vsyncadd [#allocation7], %s26
      %s28 = sshll.u32 [#allocation6], 4
      %s29 = int_to_ptr.vmem [resolvable:$true] %s28
      %34 = dma.hbm_to_vmem [thread:$0]  %s1, 256, %s29, [#allocation7], 64, 64, 4
    $region9: #{tpu_custom_call.1} parent=1 // pred_fallthru
      _
    // Predicated region
    $region10: #{tpu_custom_call.1} parent=1 // pred_check
      _
    $region11: #{tpu_custom_call.1} parent=1 // pred_check_branch
      %36 = sbr.rel (0) target = $region13
    $region12: #{tpu_custom_call.1} parent=1 // pred_region
      _
    $region13: #{tpu_custom_call.1} parent=1 // pred_fallthru
      _
    // Predicated region
    $region14: #{tpu_custom_call.1} parent=1 // pred_check
      _
    $region15: #{tpu_custom_call.1} parent=1 // pred_check_branch
      %38 = sbr.rel (0) target = $region17
    $region16: #{tpu_custom_call.1} parent=1 // pred_region
      %39 = dma.done [#allocation4], 128
    $region17: #{tpu_custom_call.1} parent=1 // pred_fallthru
      _
    // Predicated region
    $region18: #{tpu_custom_call.1} parent=1 // pred_check
      _
    $region19: #{tpu_custom_call.1} parent=1 // pred_check_branch
      %41 = sbr.rel (0) target = $region21
    $region20: #{tpu_custom_call.1} parent=1 // pred_region
      %42 = dma.done [#allocation7], 256
    $region21: #{tpu_custom_call.1} parent=1 // pred_fallthru
      _
    %p44 = scmp.eq.s32.totalorder 0, 0
    // Predicated region
    $region22: #{tpu_custom_call.1} parent=1 // pred_check
      %p45 = pneg %p44
    $region23: #{tpu_custom_call.1} parent=1 // pred_check_branch
      %47 = sbr.rel (%p45) target = $region25
    $region24: #{tpu_custom_call.1} parent=1 // pred_region
      %48 = vst [vmem:[#allocation2] sm:$0xff] 0.0
      %49 = vst [vmem:[#allocation2 + $0x8] sm:$0xff] 0.0
    $region25: #{tpu_custom_call.1} parent=1 // pred_fallthru
      _
    %v50 = vld [vmem:[#allocation2] sm:$0xff]
    %v51 = vld [vmem:[#allocation2 + $0x8] sm:$0xff]
    %v52 = vld [vmem:[#allocation3] sm:$0xf]
    %v53 = vld [vmem:[#allocation3 + $0x4] sm:$0xf]
    %v54 = vld [vmem:[#allocation6] sm:$0xf]
    %v55 = vld [vmem:[#allocation6 + $0x4] sm:$0xf]
    %v56 = vld [vmem:[#allocation6 + $0x8] sm:$0xf]
    %v57 = vld [vmem:[#allocation6 + $0xc] sm:$0xf]
    %v60 = vunpack.c.l.b16 %v52
    %v61 = vunpack.c.l.b16 %v53
    %v62 = vpack.c.b16 %v61, %v60
    %v67 = vunpack.c.l.b16 %v54
    %v68 = vunpack.c.l.b16 %v55
    %v69 = vunpack.c.l.b16 %v56
    %v70 = vunpack.c.l.b16 %v57
    %v71 = vpack.c.b16 %v68, %v67
    %v72 = vpack.c.b16 %v70, %v69
    %vm75 = vcmask 261120
    %v77 = vsel %vm75, %v62, 0
    %79 = vmatprep.subr.bf16.mxu0 0
    %80 = vmatpush1.bf16.msra.mxu0 0
    %81 = vmatprep.subr.bf16.mxu0 0
    %82 = vmatpush1.bf16.msra.mxu0 0
    %83 = vmatprep.subr.bf16.mxu0 0
    %84 = vmatpush1.bf16.msra.mxu0 0
    %85 = vmatprep.subr.bf16.mxu0 0
    %86 = vmatpush1.bf16.msra.mxu0 0
    %87 = vmatprep.subr.bf16.mxu0 0
    %88 = vmatpush1.bf16.msra.mxu0 0
    %89 = vmatprep.subr.bf16.mxu0 0
    %90 = vmatpush1.bf16.msra.mxu0 0
    %91 = vmatprep.subr.bf16.mxu0 0
    %92 = vmatpush1.bf16.msra.mxu0 %v72
    %93 = vmatprep.subr.bf16.mxu0 0
    %94 = vmatpush1.bf16.msra.mxu0 %v71
    %95 = vmatprep.subr.bf16.mxu0 0
    %96 = vmatpush2.bf16.msra.mxu0 0
    %97 = vmatprep.subr.bf16.mxu0 0
    %98 = vmatpush2.bf16.msra.mxu0 0
    %99 = vmatprep.subr.bf16.mxu0 0
    %100 = vmatpush2.bf16.msra.mxu0 0
    %101 = vmatprep.subr.bf16.mxu0 0
    %102 = vmatpush2.bf16.msra.mxu0 0
    %103 = vmatprep.subr.bf16.mxu0 0
    %104 = vmatpush2.bf16.msra.mxu0 0
    %105 = vmatprep.subr.bf16.mxu0 0
    %106 = vmatpush2.bf16.msra.mxu0 0
    %107 = vmatprep.subr.bf16.mxu0 0
    %108 = vmatpush2.bf16.msra.mxu0 0
    %109 = vmatprep.subr.bf16.mxu0 0
    %110 = vmatpush2.bf16.msra.mxu0 0
    %111 = vmatprep.mubr.bf16.mxu0 0
    %112 = vmatmul.mubr.bf16.gmra.mxu0 %v77
    %v113 = vpop.f32.mrf.mxu0
    %v114 = vadd.f32 0.0, %v113
    %v115 = vpop.f32.mrf.mxu0
    %v116 = vpop.f32.mrf.mxu0
    %v117 = vadd.f32 0.0, %v116
    %v118 = vpop.f32.mrf.mxu0
    %119 = vdwg.mxu0
    %v120 = vadd.f32 %v50, %v114
    %v121 = vadd.f32 %v51, %v117
    %122 = vst [vmem:[#allocation2] sm:$0xff] %v120
    %123 = vst [vmem:[#allocation2 + $0x8] sm:$0xff] %v121
    // Predicated region
    $region26: #{tpu_custom_call.1} parent=1 // pred_check
      %p124 = pneg %p44
    $region27: #{tpu_custom_call.1} parent=1 // pred_check_branch
      %126 = sbr.rel (%p124) target = $region29
    $region28: #{tpu_custom_call.1} parent=1 // pred_region
      %v127 = vld [vmem:[#allocation2] sm:$0xff]
      %v128 = vld [vmem:[#allocation2 + $0x8] sm:$0xff]
      %v129 = vld [vmem:[%s2] sm:$0x1]
      %v131 = vlaneseq
      %v132 = vshrl.u32 %v131, 7
      %v133 = vsub.s32 0, %v132
      %v134 = vrot.slane %v129, %v133
      %v136 = vadd.f32 %v127, %v134
      %v137 = vadd.f32 %v128, %v134
      %138 = vst [vmem:[#allocation8] sm:$0xff] %v136
      %139 = vst [vmem:[#allocation8 + $0x8] sm:$0xff] %v137
    $region29: #{tpu_custom_call.1} parent=1 // pred_fallthru
      _
    // Predicated region
    $region30: #{tpu_custom_call.1} parent=1 // pred_check
      _
    $region31: #{tpu_custom_call.1} parent=1 // pred_check_branch
      %141 = sbr.rel (0) target = $region33
    $region32: #{tpu_custom_call.1} parent=1 // pred_region
      %s143 = ssub.s32 256, 256
      %144 = vsyncadd [#allocation5], %s143
      %s145 = sshll.u32 [#allocation8], 4
      %s146 = int_to_ptr.vmem [resolvable:$true] %s145
      %151 = dma.vmem_to_hbm [thread:$0]  %s146, 256, %s3, [#allocation5], 128, 128, 8
    $region33: #{tpu_custom_call.1} parent=1 // pred_fallthru
      _
    // Predicated region
    $region34: #{tpu_custom_call.1} parent=1 // pred_check
      _
    $region35: #{tpu_custom_call.1} parent=1 // pred_check_branch
      %153 = sbr.rel (0) target = $region37
    $region36: #{tpu_custom_call.1} parent=1 // pred_region
      %154 = dma.done [#allocation5], 256
    $region37: #{tpu_custom_call.1} parent=1 // pred_fallthru
      _
    %155 = vsyncpa [#allocation4], 1
    %156 = vsyncpa [#allocation7], 1
    %157 = vsyncpa [#allocation5], 1

</llo_original>
